<compile_context>
chip_gen: v7x
topology: tpu7x:2x2x1
jax: 0.10.0
libtpu: 0.0.40
codegen_flags: <defaults>
</compile_context>

<pallas_src>
import math

import jax
import jax.numpy as jnp
from jax.experimental import pallas as pl
from jax.experimental.pallas import tpu as pltpu


def _timestep_kernel(t_ref, f_ref, o_ref):
    # t_ref: (TILE_N, 1) f32, f_ref: (1, half) f32, o_ref: (TILE_N, dim) out dtype.
    half = f_ref.shape[1]
    tile_n, dim_out = o_ref.shape

    args = t_ref[...] * f_ref[...]                     # (TILE_N, half), f32

    parts = [jnp.cos(args), jnp.sin(args)]
    if dim_out > 2 * half:                             # odd dim -> zero column
        parts.append(jnp.zeros((tile_n, dim_out - 2 * half), jnp.float32))

    # Single full-width store (lane-dense, unmasked when dim is 128-aligned).
    o_ref[...] = jnp.concatenate(parts, axis=-1).astype(o_ref.dtype)


def _choose_tile_n(n: int, dim: int) -> int:
    # Cap the output tile at ~4 MiB so (double-buffered in+out) stays far under
    # v7x's 64 MiB per-TC VMEM; clamp to a sublane-aligned multiple of 8.
    max_rows_by_vmem = max(8, (4 * 1024 * 1024) // max(1, dim * 4))
    tile = min(1024, max_rows_by_vmem, max(8, n))
    tile = max(8, (tile // 8) * 8)
    return tile


def timestep_embedding(t: jax.Array, dim: int, dtype=jnp.float32) -> jax.Array:
    """Pallas equivalent of Timestep(dim)(t). t: (N,) -> (N, dim)."""
    assert t.ndim == 1
    assert dim >= 2, "dim must be >= 2"
    n = t.shape[0]
    half = dim // 2

    tile_n = _choose_tile_n(n, dim)
    n_pad = pl.cdiv(n, tile_n) * tile_n

    t2d = t.astype(jnp.float32).reshape(n, 1)
    if n_pad != n:
        t2d = jnp.pad(t2d, ((0, n_pad - n), (0, 0)))

    # Hoisted constant: freqs = exp(-log(10000) * arange(half) / half).
    freqs = jnp.exp(
        -math.log(10000.0) * jnp.arange(half, dtype=jnp.float32) / half
    ).reshape(1, half)

    out = pl.pallas_call(
        _timestep_kernel,
        out_shape=jax.ShapeDtypeStruct((n_pad, dim), dtype),
        grid=(n_pad // tile_n,),
        in_specs=[
            pl.BlockSpec((tile_n, 1), lambda i: (i, 0)),   # timesteps tile
            pl.BlockSpec((1, half), lambda i: (0, 0)),     # shared freqs table
        ],
        out_specs=pl.BlockSpec((tile_n, dim), lambda i: (i, 0)),
        compiler_params=pltpu.CompilerParams(
            dimension_semantics=("parallel",),
        ),
    )(t2d, freqs)

    if n_pad != n:
        out = out[:n]
    return out


class Timestep:
    """Mirror of the (parameter-free) PyTorch module."""

    def __init__(self, dim: int):
        self.dim = dim

    def __call__(self, t: jax.Array) -> jax.Array:
        return timestep_embedding(t, self.dim)


def _reference(t: jax.Array, dim: int) -> jax.Array:
    half = dim // 2
    freqs = jnp.exp(
        -math.log(10000.0) * jnp.arange(half, dtype=jnp.float32) / half
    )
    args = t.astype(jnp.float32)[:, None] * freqs[None, :]
    emb = jnp.concatenate([jnp.cos(args), jnp.sin(args)], axis=-1)
    if dim % 2:
        emb = jnp.concatenate([emb, jnp.zeros_like(emb[:, :1])], axis=-1)
    return emb


if __name__ == "__main__":
    key = jax.random.PRNGKey(0)
    n, dim = 8, 256  # small shapes: batch of 8 timesteps, 256-dim embedding

    # Deterministic "timesteps" (like diffusion steps in [0, 1000)).
    t = jax.random.uniform(key, (n,), dtype=jnp.float32, minval=0.0, maxval=1000.0)

    model = Timestep(dim)
    out = model(t)
    out = jax.block_until_ready(out)

    ref = _reference(t, dim)
    assert out.shape == (n, dim), out.shape
    assert jnp.allclose(out, ref, atol=1e-5, rtol=1e-5), "mismatch vs reference"

    # Also exercise an odd embedding dim (zero column handled in-kernel) and a
    # batch that is not a multiple of the tile size.
    n2, dim2 = 13, 129
    t2 = jax.random.uniform(
        jax.random.PRNGKey(1), (n2,), dtype=jnp.float32, minval=0.0, maxval=1000.0
    )
    out2 = jax.block_until_ready(Timestep(dim2)(t2))
    ref2 = _reference(t2, dim2)
    assert out2.shape == (n2, dim2), out2.shape
    assert jnp.allclose(out2, ref2, atol=1e-5, rtol=1e-5), "mismatch vs reference (odd dim)"

    print("KERNEL_OK")
</pallas_src>

<mosaic_0001>
module attributes {stable_mosaic.version = 11 : i64} {
  func.func @_timestep_kernel(%arg0: i32, %arg1: memref<8x1xf32, #tpu.memory_space<vmem>>, %arg2: memref<1x128xf32, #tpu.memory_space<vmem>>, %arg3: memref<8x256xf32, #tpu.memory_space<vmem>>) attributes {dimension_semantics = [#tpu.dimension_semantics<parallel>], iteration_bounds = array<i64: 1>, scalar_prefetch = 0 : i64, scratch_operands = 0 : i64, tpu.core_type = #tpu.core_type<tc>, window_params = [{transform_indices = @transform_0, window_bounds = array<i64: 8, 1>}, {pipeline_mode = #tpu.pipeline_mode<synchronous>, transform_indices = @transform_1, window_bounds = array<i64: 1, 128>}, {transform_indices = @transform_2, window_bounds = array<i64: 8, 256>}]} {
    %c0 = arith.constant 0 : index
    %c0_0 = arith.constant 0 : index
    %0 = vector.load %arg1[%c0, %c0_0] : memref<8x1xf32, #tpu.memory_space<vmem>>, vector<8x1xf32>
    %c0_1 = arith.constant 0 : index
    %c0_2 = arith.constant 0 : index
    %1 = vector.load %arg2[%c0_1, %c0_2] : memref<1x128xf32, #tpu.memory_space<vmem>>, vector<1x128xf32>
    %2 = vector.broadcast %0 : vector<8x1xf32> to vector<8x128xf32>
    %3 = vector.broadcast %1 : vector<1x128xf32> to vector<8x128xf32>
    %4 = arith.mulf %2, %3 : vector<8x128xf32>
    %5 = math.cos %4 : vector<8x128xf32>
    %6 = math.sin %4 : vector<8x128xf32>
    %7 = tpu.concatenate %5, %6 in 1 : vector<8x128xf32>, vector<8x128xf32> -> vector<8x256xf32>
    %c0_3 = arith.constant 0 : index
    %c0_4 = arith.constant 0 : index
    %8 = vector.load %arg3[%c0_3, %c0_4] : memref<8x256xf32, #tpu.memory_space<vmem>>, vector<8x256xf32>
    tpu.vector_store %arg3[%c0_3, %c0_4], %7 {strides = array<i32>} : memref<8x256xf32, #tpu.memory_space<vmem>>, vector<8x256xf32>,
    return
  }
  func.func @transform_0(%arg0: i32) -> (i32, i32) {
    %c0_i32 = arith.constant 0 : i32
    %c0_i32_0 = arith.constant 0 : i32
    return %arg0, %c0_i32 : i32, i32
  }
  func.func @transform_1(%arg0: i32) -> (i32, i32) {
    %c0_i32 = arith.constant 0 : i32
    %c0_i32_0 = arith.constant 0 : i32
    %c0_i32_1 = arith.constant 0 : i32
    return %c0_i32, %c0_i32_0 : i32, i32
  }
  func.func @transform_2(%arg0: i32) -> (i32, i32) {
    %c0_i32 = arith.constant 0 : i32
    %c0_i32_0 = arith.constant 0 : i32
    return %arg0, %c0_i32 : i32, i32
  }
}

</mosaic_0001>

<llo_original>
// kernel: tpu_custom_call.1
$region0: #{tpu_custom_call.1}
  #allocation0 [shape = 'u32[]', space=smem, size = 0x4, offset = 0x4, fixed_abs, tag = 'smem constant byte address 0x4 - core index']
  #allocation1 [shape = 'u32[144,128]{1,0:T(1,128)}', space=vmem, size = 0x12000, scoped, tag = 'internal scratch']
  %s0 = inlined_call_operand.vmem [shape: f32[8,1], index: 0, kind: input, shape index: {}]
  %s1 = inlined_call_operand.vmem [shape: f32[1,128], index: 1, kind: input, shape index: {}]
  %s2 = inlined_call_operand.hbm [shape: f32[8,256], index: 2, kind: output, shape index: {}]
  %s3 = sld [smem:[#allocation0]]
  $region18: #{tpu_custom_call.1} parent=0
    _
  %s5 = ssub.s32 1, %s3
  %s6 = scalar_select 0, %s5, %s3
  $region1: #{tpu_custom_call.1} parent=0
    #allocation2 [shape = 'u8[8192]{0}', space=vmem, size = 0x2000, scoped, tag = 'output window, operand 0, single buffered']
    #allocation3 [shape = 's32[1]{0}', space=sflag, size = 0x4, scoped, tag = 'scoped memory for tpu_custom_call.1']
    %7 = vsyncpa [#allocation3], 0
    // Predicated region
    $region2: #{tpu_custom_call.1} parent=1 // pred_check
      _
    $region3: #{tpu_custom_call.1} parent=1 // pred_check_branch
      %9 = sbr.rel (0) target = $region5
    $region4: #{tpu_custom_call.1} parent=1 // pred_region
      _
    $region5: #{tpu_custom_call.1} parent=1 // pred_fallthru
      _
    // Predicated region
    $region6: #{tpu_custom_call.1} parent=1 // pred_check
      _
    $region7: #{tpu_custom_call.1} parent=1 // pred_check_branch
      %11 = sbr.rel (0) target = $region9
    $region8: #{tpu_custom_call.1} parent=1 // pred_region
      _
    $region9: #{tpu_custom_call.1} parent=1 // pred_fallthru
      _
    %v12 = vld [vmem:[%s0] sm:$0xff]
    %v13 = vld [vmem:[%s1] sm:$0x1]
    %15 = vset.pattern.permute.xlu0 0
    %16 = vperm.xlu0 %15, %v12
    %v17 = vpop.permute.xlu0 %16
    %v20 = vlaneseq
    %v21 = vshrl.u32 %v20, 7
    %v22 = vsub.s32 0, %v21
    %v23 = vrot.slane %v13, %v22
    %v25 = vmul.f32 %v17, %v23
    %v26 = vand.u32 2147483647, %v25
    %vm27 = vcmp.le.f32.partialorder %v26, 0.7853982
    %vm28 = vcmp.lt.s32.totalorder %v25, 0
    %v29 = vand.u32 %v25, 2139095040
    %v30 = vshrl.u32 %v29, 23
    %v31 = vsub.s32 %v30, 127
    %v32 = vand.u32 2147483647, %v25
    %v33 = vand.u32 %v32, 8388607
    %v34 = vor.u32 %v33, 8388608
    %v35 = vsub.s32 0, %v34
    %v36 = vadd.s32 %v31, 1
    %vm37 = vcmp.gt.s32.totalorder %v36, 0
    %v38 = vsel %vm37, %v36, 0
    %v39 = vshrl.u32 %v38, 5
    %v40 = vand.u32 %v38, 31
    %v41 = vsub.s32 32, %v40
    %v42 = vshrl.u32 683565275, %v41
    %v43 = vshll.u32 683565275, %v40
    %v44 = vshrl.u32 2475754826, %v41
    %v45 = vor.u32 %v43, %v44
    %v46 = vshll.u32 2475754826, %v40
    %v47 = vshrl.u32 2131351028, %v41
    %v48 = vor.u32 %v46, %v47
    %v49 = vshll.u32 2131351028, %v40
    %v50 = vshrl.u32 2102212464, %v41
    %v51 = vor.u32 %v49, %v50
    %v52 = vshll.u32 2102212464, %v40
    %v53 = vshrl.u32 920167782, %v41
    %v54 = vor.u32 %v52, %v53
    %v55 = vshll.u32 920167782, %v40
    %v56 = vshrl.u32 1326507024, %v41
    %v57 = vor.u32 %v55, %v56
    %vm58 = vcmp.lt.s32.totalorder %v39, 1
    %vm59 = vcmp.lt.s32.totalorder %v39, 2
    %vm60 = vcmp.lt.s32.totalorder %v39, 3
    %vm61 = vcmp.lt.s32.totalorder %v39, 4
    %v62 = vsel %vm58, %v42, %v45
    %v63 = vsel %vm61, %v51, 2102212464
    %v64 = vsel %vm60, %v48, %v63
    %v65 = vsel %vm59, %v62, %v64
    %v66 = vsel %vm58, %v45, %v48
    %v67 = vsel %vm61, %v54, 920167782
    %v68 = vsel %vm60, %v51, %v67
    %v69 = vsel %vm59, %v66, %v68
    %v70 = vsel %vm58, %v48, %v51
    %v71 = vsel %vm61, %v57, 1326507024
    %v72 = vsel %vm60, %v54, %v71
    %v73 = vsel %vm59, %v70, %v72
    %v74 = vshll.u32 %v34, 8
    %v75 = vmul.u32.u64.compose %v74, %v73
    %v76 = vextract.low.u32 %v75
    %v77 = vextract.high.u32 %v75
    %v78 = vmul.u32.u64.compose %v74, %v69
    %v79 = vextract.low.u32 %v78
    %v80 = vextract.high.u32 %v78
    %v81 = vmul.u32 %v74, %v65
    %v82 = vadd.s32 %v77, %v79
    %vm83 = vc.u32 %v77, %v79
    %v84 = vadd.s32 %v80, 1
    %v85 = vsel %vm83, %v84, %v80
    %v86 = vadd.s32 %v81, %v85
    %v87 = vadd.s32 %v86, 536870912
    %v88 = vshrl.u32 %v87, 30
    %v89 = vshll.u32 %v88, 30
    %v90 = vsub.s32 %v86, %v89
    %vm91 = vcmp.lt.s32.totalorder %v90, 0
    %v92 = vsub.s32 0, %v90
    %v93 = vsel %vm91, %v92, %v90
    %v94 = vclz %v93
    %v95 = vsub.s32 %v94, 2
    %vm96 = vcmp.gt.s32.totalorder 0, %v95
    %v97 = vsel %vm96, 0, %v95
    %v98 = vsub.s32 32, %v97
    %v99 = vshll.u32 %v90, %v97
    %v100 = vshrl.u32 %v82, %v98
    %v101 = vor.u32 %v99, %v100
    %v102 = vsub.s32 4294967266, %v97
    %v103 = vadd.s32 %v102, 127
    %v104 = vshll.u32 %v103, 23
    %v105 = vor.u32 4788187, %v104
    %v106 = vand.u32 2147483647, %v105
    %v108 = vcvt.s32.f32 %v101
    %v109 = vmul.f32 %v108, %v106
    %v110 = vxor.u32 %v109, 2147483648
    %v111 = vsel %vm28, %v110, %v109
    %v112 = vsub.s32 4, %v88
    %v113 = vsel %vm28, %v112, %v88
    %v114 = vsel %vm27, %v25, %v111
    %v115 = vsel %vm27, 0, %v113
    %v116 = vcosq.f32.pop %v114
    %v117 = vsinq.f32.pop %v114
    %vm118 = vweird.f32 %v25
    %v119 = vand.u32 %v115, 3
    %vm120 = vcmp.lt.s32.totalorder %v119, 2
    %vm121 = vcmp.eq.s32.totalorder %v119, 0
    %v122 = vxor.u32 %v117, 2147483648
    %v123 = vsel %vm121, %v116, %v122
    %vm124 = vcmp.eq.s32.totalorder %v119, 2
    %v125 = vxor.u32 %v116, 2147483648
    %v126 = vsel %vm124, %v125, %v117
    %v127 = vsel %vm120, %v123, %v126
    %v128 = vsel %vm118, nan, %v127
    %v129 = vand.u32 2147483647, %v25
    %vm130 = vcmp.le.f32.partialorder %v129, 0.7853982
    %vm131 = vcmp.lt.s32.totalorder %v25, 0
    %v132 = vand.u32 %v25, 2139095040
    %v133 = vshrl.u32 %v132, 23
    %v134 = vsub.s32 %v133, 127
    %v135 = vand.u32 2147483647, %v25
    %v136 = vand.u32 %v135, 8388607
    %v137 = vor.u32 %v136, 8388608
    %v138 = vsub.s32 0, %v137
    %v139 = vadd.s32 %v134, 1
    %vm140 = vcmp.gt.s32.totalorder %v139, 0
    %v141 = vsel %vm140, %v139, 0
    %v142 = vshrl.u32 %v141, 5
    %v143 = vand.u32 %v141, 31
    %v144 = vsub.s32 32, %v143
    %v145 = vshrl.u32 683565275, %v144
    %v146 = vshll.u32 683565275, %v143
    %v147 = vshrl.u32 2475754826, %v144
    %v148 = vor.u32 %v146, %v147
    %v149 = vshll.u32 2475754826, %v143
    %v150 = vshrl.u32 2131351028, %v144
    %v151 = vor.u32 %v149, %v150
    %v152 = vshll.u32 2131351028, %v143
    %v153 = vshrl.u32 2102212464, %v144
    %v154 = vor.u32 %v152, %v153
    %v155 = vshll.u32 2102212464, %v143
    %v156 = vshrl.u32 920167782, %v144
    %v157 = vor.u32 %v155, %v156
    %v158 = vshll.u32 920167782, %v143
    %v159 = vshrl.u32 1326507024, %v144
    %v160 = vor.u32 %v158, %v159
    %vm161 = vcmp.lt.s32.totalorder %v142, 1
    %vm162 = vcmp.lt.s32.totalorder %v142, 2
    %vm163 = vcmp.lt.s32.totalorder %v142, 3
    %vm164 = vcmp.lt.s32.totalorder %v142, 4
    %v165 = vsel %vm161, %v145, %v148
    %v166 = vsel %vm164, %v154, 2102212464
    %v167 = vsel %vm163, %v151, %v166
    %v168 = vsel %vm162, %v165, %v167
    %v169 = vsel %vm161, %v148, %v151
    %v170 = vsel %vm164, %v157, 920167782
    %v171 = vsel %vm163, %v154, %v170
    %v172 = vsel %vm162, %v169, %v171
    %v173 = vsel %vm161, %v151, %v154
    %v174 = vsel %vm164, %v160, 1326507024
    %v175 = vsel %vm163, %v157, %v174
    %v176 = vsel %vm162, %v173, %v175
    %v177 = vshll.u32 %v137, 8
    %v178 = vmul.u32.u64.compose %v177, %v176
    %v179 = vextract.low.u32 %v178
    %v180 = vextract.high.u32 %v178
    %v181 = vmul.u32.u64.compose %v177, %v172
    %v182 = vextract.low.u32 %v181
    %v183 = vextract.high.u32 %v181
    %v184 = vmul.u32 %v177, %v168
    %v185 = vadd.s32 %v180, %v182
    %vm186 = vc.u32 %v180, %v182
    %v187 = vadd.s32 %v183, 1
    %v188 = vsel %vm186, %v187, %v183
    %v189 = vadd.s32 %v184, %v188
    %v190 = vadd.s32 %v189, 536870912
    %v191 = vshrl.u32 %v190, 30
    %v192 = vshll.u32 %v191, 30
    %v193 = vsub.s32 %v189, %v192
    %vm194 = vcmp.lt.s32.totalorder %v193, 0
    %v195 = vsub.s32 0, %v193
    %v196 = vsel %vm194, %v195, %v193
    %v197 = vclz %v196
    %v198 = vsub.s32 %v197, 2
    %vm199 = vcmp.gt.s32.totalorder 0, %v198
    %v200 = vsel %vm199, 0, %v198
    %v201 = vsub.s32 32, %v200
    %v202 = vshll.u32 %v193, %v200
    %v203 = vshrl.u32 %v185, %v201
    %v204 = vor.u32 %v202, %v203
    %v205 = vsub.s32 4294967266, %v200
    %v206 = vadd.s32 %v205, 127
    %v207 = vshll.u32 %v206, 23
    %v208 = vor.u32 4788187, %v207
    %v209 = vand.u32 2147483647, %v208
    %v211 = vcvt.s32.f32 %v204
    %v212 = vmul.f32 %v211, %v209
    %v213 = vxor.u32 %v212, 2147483648
    %v214 = vsel %vm131, %v213, %v212
    %v215 = vsub.s32 4, %v191
    %v216 = vsel %vm131, %v215, %v191
    %v217 = vsel %vm130, %v25, %v214
    %v218 = vsel %vm130, 0, %v216
    %v219 = vcosq.f32.pop %v217
    %v220 = vsinq.f32.pop %v217
    %vm221 = vweird.f32 %v25
    %v222 = vadd.s32 %v218, 3
    %v223 = vand.u32 %v222, 3
    %vm224 = vcmp.lt.s32.totalorder %v223, 2
    %vm225 = vcmp.eq.s32.totalorder %v223, 0
    %v226 = vxor.u32 %v220, 2147483648
    %v227 = vsel %vm225, %v219, %v226
    %vm228 = vcmp.eq.s32.totalorder %v223, 2
    %v229 = vxor.u32 %v219, 2147483648
    %v230 = vsel %vm228, %v229, %v220
    %v231 = vsel %vm224, %v227, %v230
    %v232 = vsel %vm221, nan, %v231
    %233 = vst [vmem:[#allocation2] sm:$0xff] %v128
    %234 = vst [vmem:[#allocation2 + $0x8] sm:$0xff] %v232
    // Predicated region
    $region10: #{tpu_custom_call.1} parent=1 // pred_check
      _
    $region11: #{tpu_custom_call.1} parent=1 // pred_check_branch
      %236 = sbr.rel (0) target = $region13
    $region12: #{tpu_custom_call.1} parent=1 // pred_region
      %s238 = ssub.s32 256, 256
      %239 = vsyncadd [#allocation3], %s238
      %s241 = sshll.u32 [#allocation2], 4
      %s242 = int_to_ptr.vmem [resolvable:$true] %s241
      %244 = dma.vmem_to_hbm [thread:$0]  %s242, 256, %s2, [#allocation3]
    $region13: #{tpu_custom_call.1} parent=1 // pred_fallthru
      _
    // Predicated region
    $region14: #{tpu_custom_call.1} parent=1 // pred_check
      _
    $region15: #{tpu_custom_call.1} parent=1 // pred_check_branch
      %246 = sbr.rel (0) target = $region17
    $region16: #{tpu_custom_call.1} parent=1 // pred_region
      %247 = dma.done [#allocation3], 256
    $region17: #{tpu_custom_call.1} parent=1 // pred_fallthru
      _
    %248 = vsyncpa [#allocation3], 1

</llo_original>
